<compile_context>
chip_gen: v7x
topology: tpu7x:2x2x1
jax: 0.10.0
libtpu: 0.0.40
codegen_flags: <defaults>
</compile_context>

<pallas_src>
import jax
import jax.numpy as jnp
from jax.experimental import pallas as pl
from jax.experimental.pallas import tpu as pltpu

_LANE = 128
_MAX_TILE_LANES = 512 * _LANE  # 65536 lanes -> 768 KiB per (3, TN) f32 block


# ---------------------------------------------------------------------------
# Fused kernel: phase 0 = per-coordinate min/max of x and y (lane reduce),
#               phase 1 = y_remap = (y - c_y) * s + c_x
# ---------------------------------------------------------------------------
def _fused_bbox_kernel(x_ref, y_ref, out_ref, minx, maxx, miny, maxy):
    p = pl.program_id(0)  # phase: 0 = reduce, 1 = remap
    t = pl.program_id(1)  # lane-tile index

    @pl.when(jnp.logical_and(p == 0, t == 0))
    def _init():
        minx[...] = jnp.full_like(minx, jnp.inf)
        maxx[...] = jnp.full_like(maxx, -jnp.inf)
        miny[...] = jnp.full_like(miny, jnp.inf)
        maxy[...] = jnp.full_like(maxy, -jnp.inf)

    @pl.when(p == 0)
    def _reduce():
        xt = x_ref[...]  # (D, TN) -- lane-dense
        yt = y_ref[...]
        minx[...] = jnp.minimum(minx[...], jnp.min(xt, axis=-1, keepdims=True))
        maxx[...] = jnp.maximum(maxx[...], jnp.max(xt, axis=-1, keepdims=True))
        miny[...] = jnp.minimum(miny[...], jnp.min(yt, axis=-1, keepdims=True))
        maxy[...] = jnp.maximum(maxy[...], jnp.max(yt, axis=-1, keepdims=True))

    @pl.when(p == 1)
    def _remap():
        c_x = 0.5 * (minx[...] + maxx[...])                       # (D, 1)
        c_y = 0.5 * (miny[...] + maxy[...])                       # (D, 1)
        s = 1.0 + (maxy[...] - miny[...]) - (maxx[...] - minx[...])
        out_ref[...] = ((y_ref[...] - c_y) * s + c_x).astype(out_ref.dtype)


# ---------------------------------------------------------------------------
# Wrapper: lane-dense layout plumbing + single pallas_call
# ---------------------------------------------------------------------------
def _pad_lanes(pos_t, n_pad):
    """pos_t: (D, N). Replicate the last column so min/max are unaffected."""
    d, n = pos_t.shape
    if n == n_pad:
        return pos_t
    return jnp.pad(pos_t, ((0, 0), (0, n_pad - n)), mode="edge")


def bbox_adapt(x_pos, y_pos):
    """Pallas implementation of BBoxAdapter.forward.

    x_pos: (Nx, D) float32 -- target model positions
    y_pos: (Ny, D) float32 -- source model positions (remapped)
    returns remapped y_pos of shape (Ny, D).
    """
    nx, d = x_pos.shape
    ny, d2 = y_pos.shape
    assert d == d2

    # Common padded lane extent for both clouds (edge padding keeps min/max
    # exact; extra remapped columns are sliced off at the end).
    n_max = max(nx, ny)
    tile_n = min(_MAX_TILE_LANES, pl.cdiv(n_max, _LANE) * _LANE)
    n_pad = pl.cdiv(n_max, tile_n) * tile_n
    num_tiles = n_pad // tile_n

    x_t = _pad_lanes(jnp.transpose(x_pos), n_pad)  # (D, n_pad)
    y_t = _pad_lanes(jnp.transpose(y_pos), n_pad)  # (D, n_pad)

    out_t = pl.pallas_call(
        _fused_bbox_kernel,
        out_shape=jax.ShapeDtypeStruct((d, n_pad), y_pos.dtype),
        grid_spec=pltpu.PrefetchScalarGridSpec(
            num_scalar_prefetch=0,
            grid=(2, num_tiles),
            in_specs=[
                # x: walked once during phase 0, parked on block 0 in phase 1.
                pl.BlockSpec((d, tile_n), lambda p, t: (0, t * (1 - p))),
                # y: walked in both phases (reduce, then remap).
                pl.BlockSpec((d, tile_n), lambda p, t: (0, t)),
            ],
            # Output stays on block 0 (never written) during phase 0, then is
            # written exactly once per tile in phase 1.
            out_specs=pl.BlockSpec((d, tile_n), lambda p, t: (0, t * p)),
            scratch_shapes=[pltpu.VMEM((d, 1), jnp.float32)] * 4,
        ),
        compiler_params=pltpu.CompilerParams(
            # Phase axis and the shared reduce/remap tile axis are sequential.
            dimension_semantics=("arbitrary", "arbitrary"),
        ),
    )(x_t, y_t)

    return jnp.transpose(out_t[:, :ny])


# ---------------------------------------------------------------------------
# Pure-JAX reference (mirrors the PyTorch forward exactly)
# ---------------------------------------------------------------------------
def bbox_adapt_ref(x_pos, y_pos):
    mins = [jnp.min(x_pos, axis=0, keepdims=True), jnp.min(y_pos, axis=0, keepdims=True)]
    maxs = [jnp.max(x_pos, axis=0, keepdims=True), jnp.max(y_pos, axis=0, keepdims=True)]
    c = [0.5 * (mins[i] + maxs[i]) for i in (0, 1)]
    dd = [maxs[i] - mins[i] for i in (0, 1)]
    s = 1.0 + dd[1] - dd[0]
    return (y_pos - c[1]) * s + c[0]


if __name__ == "__main__":
    key = jax.random.PRNGKey(0)
    kx, ky = jax.random.split(key)

    # Small point clouds; non-multiples of 128 exercise the padding path.
    Nx, Ny, D = 150, 96, 3
    x_pos = jax.random.normal(kx, (Nx, D), dtype=jnp.float32) * 2.0 + 1.0
    y_pos = jax.random.normal(ky, (Ny, D), dtype=jnp.float32) * 0.5 - 3.0

    out = bbox_adapt(x_pos, y_pos)
    out = jax.block_until_ready(out)

    ref = bbox_adapt_ref(x_pos, y_pos)
    assert out.shape == (Ny, D)
    assert jnp.allclose(out, ref, atol=1e-5, rtol=1e-5), "mismatch vs reference"

    print("KERNEL_OK")
</pallas_src>

<mosaic_0001>
module attributes {stable_mosaic.version = 11 : i64} {
  func.func @_fused_bbox_kernel(%arg0: i32, %arg1: i32, %arg2: memref<3x256xf32, #tpu.memory_space<vmem>>, %arg3: memref<3x256xf32, #tpu.memory_space<vmem>>, %arg4: memref<3x256xf32, #tpu.memory_space<vmem>>, %arg5: memref<3x1xf32, #tpu.memory_space<vmem>>, %arg6: memref<3x1xf32, #tpu.memory_space<vmem>>, %arg7: memref<3x1xf32, #tpu.memory_space<vmem>>, %arg8: memref<3x1xf32, #tpu.memory_space<vmem>>) attributes {dimension_semantics = [#tpu.dimension_semantics<arbitrary>, #tpu.dimension_semantics<arbitrary>], iteration_bounds = array<i64: 2, 1>, scalar_prefetch = 0 : i64, scratch_operands = 4 : i64, tpu.core_type = #tpu.core_type<tc>, window_params = [{transform_indices = @transform_0, window_bounds = array<i64: 3, 256>}, {transform_indices = @transform_1, window_bounds = array<i64: 3, 256>}, {transform_indices = @transform_2, window_bounds = array<i64: 3, 256>}]} {
    %c0_i32 = arith.constant 0 : i32
    %0 = arith.cmpi eq, %arg0, %c0_i32 : i32
    %c0_i32_0 = arith.constant 0 : i32
    %1 = arith.cmpi eq, %arg1, %c0_i32_0 : i32
    %2 = arith.andi %0, %1 : i1
    %3 = arith.extui %2 : i1 to i32
    %c0_i32_1 = arith.constant 0 : i32
    %4 = arith.cmpi ne, %3, %c0_i32_1 : i32
    scf.if %4 {
      %cst = arith.constant 0x7F800000 : f32
      %11 = vector.broadcast %cst : f32 to vector<3x1xf32>
      %c0 = arith.constant 0 : index
      %c0_5 = arith.constant 0 : index
      %12 = vector.load %arg5[%c0, %c0_5] : memref<3x1xf32, #tpu.memory_space<vmem>>, vector<3x1xf32>
      tpu.vector_store %arg5[%c0, %c0_5], %11 {strides = array<i32>} : memref<3x1xf32, #tpu.memory_space<vmem>>, vector<3x1xf32>,
      %cst_6 = arith.constant 0xFF800000 : f32
      %13 = vector.broadcast %cst_6 : f32 to vector<3x1xf32>
      %c0_7 = arith.constant 0 : index
      %c0_8 = arith.constant 0 : index
      %14 = vector.load %arg6[%c0_7, %c0_8] : memref<3x1xf32, #tpu.memory_space<vmem>>, vector<3x1xf32>
      tpu.vector_store %arg6[%c0_7, %c0_8], %13 {strides = array<i32>} : memref<3x1xf32, #tpu.memory_space<vmem>>, vector<3x1xf32>,
      %cst_9 = arith.constant 0x7F800000 : f32
      %15 = vector.broadcast %cst_9 : f32 to vector<3x1xf32>
      %c0_10 = arith.constant 0 : index
      %c0_11 = arith.constant 0 : index
      %16 = vector.load %arg7[%c0_10, %c0_11] : memref<3x1xf32, #tpu.memory_space<vmem>>, vector<3x1xf32>
      tpu.vector_store %arg7[%c0_10, %c0_11], %15 {strides = array<i32>} : memref<3x1xf32, #tpu.memory_space<vmem>>, vector<3x1xf32>,
      %cst_12 = arith.constant 0xFF800000 : f32
      %17 = vector.broadcast %cst_12 : f32 to vector<3x1xf32>
      %c0_13 = arith.constant 0 : index
      %c0_14 = arith.constant 0 : index
      %18 = vector.load %arg8[%c0_13, %c0_14] : memref<3x1xf32, #tpu.memory_space<vmem>>, vector<3x1xf32>
      tpu.vector_store %arg8[%c0_13, %c0_14], %17 {strides = array<i32>} : memref<3x1xf32, #tpu.memory_space<vmem>>, vector<3x1xf32>,
    } else {
    }
    %c0_i32_2 = arith.constant 0 : i32
    %5 = arith.cmpi eq, %arg0, %c0_i32_2 : i32
    %6 = arith.extui %5 : i1 to i32
    %c0_i32_3 = arith.constant 0 : i32
    %7 = arith.cmpi ne, %6, %c0_i32_3 : i32
    scf.if %7 {
      %c0 = arith.constant 0 : index
      %c0_5 = arith.constant 0 : index
      %11 = vector.load %arg2[%c0, %c0_5] : memref<3x256xf32, #tpu.memory_space<vmem>>, vector<3x256xf32>
      %c0_6 = arith.constant 0 : index
      %c0_7 = arith.constant 0 : index
      %12 = vector.load %arg3[%c0_6, %c0_7] : memref<3x256xf32, #tpu.memory_space<vmem>>, vector<3x256xf32>
      %c0_8 = arith.constant 0 : index
      %c0_9 = arith.constant 0 : index
      %13 = vector.load %arg5[%c0_8, %c0_9] : memref<3x1xf32, #tpu.memory_space<vmem>>, vector<3x1xf32>
      %cst = arith.constant dense<0x7F800000> : vector<3xf32>
      %14 = vector.multi_reduction <minimumf>, %11, %cst [1] : vector<3x256xf32> to vector<3xf32>
      %15 = vector.shape_cast %14 : vector<3xf32> to vector<3x1xf32>
      %16 = arith.minimumf %13, %15 : vector<3x1xf32>
      %c0_10 = arith.constant 0 : index
      %c0_11 = arith.constant 0 : index
      %17 = vector.load %arg5[%c0_10, %c0_11] : memref<3x1xf32, #tpu.memory_space<vmem>>, vector<3x1xf32>
      tpu.vector_store %arg5[%c0_10, %c0_11], %16 {strides = array<i32>} : memref<3x1xf32, #tpu.memory_space<vmem>>, vector<3x1xf32>,
      %c0_12 = arith.constant 0 : index
      %c0_13 = arith.constant 0 : index
      %18 = vector.load %arg6[%c0_12, %c0_13] : memref<3x1xf32, #tpu.memory_space<vmem>>, vector<3x1xf32>
      %cst_14 = arith.constant dense<0xFF800000> : vector<3xf32>
      %19 = vector.multi_reduction <maximumf>, %11, %cst_14 [1] : vector<3x256xf32> to vector<3xf32>
      %20 = vector.shape_cast %19 : vector<3xf32> to vector<3x1xf32>
      %21 = arith.maximumf %18, %20 : vector<3x1xf32>
      %c0_15 = arith.constant 0 : index
      %c0_16 = arith.constant 0 : index
      %22 = vector.load %arg6[%c0_15, %c0_16] : memref<3x1xf32, #tpu.memory_space<vmem>>, vector<3x1xf32>
      tpu.vector_store %arg6[%c0_15, %c0_16], %21 {strides = array<i32>} : memref<3x1xf32, #tpu.memory_space<vmem>>, vector<3x1xf32>,
      %c0_17 = arith.constant 0 : index
      %c0_18 = arith.constant 0 : index
      %23 = vector.load %arg7[%c0_17, %c0_18] : memref<3x1xf32, #tpu.memory_space<vmem>>, vector<3x1xf32>
      %cst_19 = arith.constant dense<0x7F800000> : vector<3xf32>
      %24 = vector.multi_reduction <minimumf>, %12, %cst_19 [1] : vector<3x256xf32> to vector<3xf32>
      %25 = vector.shape_cast %24 : vector<3xf32> to vector<3x1xf32>
      %26 = arith.minimumf %23, %25 : vector<3x1xf32>
      %c0_20 = arith.constant 0 : index
      %c0_21 = arith.constant 0 : index
      %27 = vector.load %arg7[%c0_20, %c0_21] : memref<3x1xf32, #tpu.memory_space<vmem>>, vector<3x1xf32>
      tpu.vector_store %arg7[%c0_20, %c0_21], %26 {strides = array<i32>} : memref<3x1xf32, #tpu.memory_space<vmem>>, vector<3x1xf32>,
      %c0_22 = arith.constant 0 : index
      %c0_23 = arith.constant 0 : index
      %28 = vector.load %arg8[%c0_22, %c0_23] : memref<3x1xf32, #tpu.memory_space<vmem>>, vector<3x1xf32>
      %cst_24 = arith.constant dense<0xFF800000> : vector<3xf32>
      %29 = vector.multi_reduction <maximumf>, %12, %cst_24 [1] : vector<3x256xf32> to vector<3xf32>
      %30 = vector.shape_cast %29 : vector<3xf32> to vector<3x1xf32>
      %31 = arith.maximumf %28, %30 : vector<3x1xf32>
      %c0_25 = arith.constant 0 : index
      %c0_26 = arith.constant 0 : index
      %32 = vector.load %arg8[%c0_25, %c0_26] : memref<3x1xf32, #tpu.memory_space<vmem>>, vector<3x1xf32>
      tpu.vector_store %arg8[%c0_25, %c0_26], %31 {strides = array<i32>} : memref<3x1xf32, #tpu.memory_space<vmem>>, vector<3x1xf32>,
    } else {
    }
    %c1_i32 = arith.constant 1 : i32
    %8 = arith.cmpi eq, %arg0, %c1_i32 : i32
    %9 = arith.extui %8 : i1 to i32
    %c0_i32_4 = arith.constant 0 : i32
    %10 = arith.cmpi ne, %9, %c0_i32_4 : i32
    scf.if %10 {
      %c0 = arith.constant 0 : index
      %c0_5 = arith.constant 0 : index
      %11 = vector.load %arg5[%c0, %c0_5] : memref<3x1xf32, #tpu.memory_space<vmem>>, vector<3x1xf32>
      %c0_6 = arith.constant 0 : index
      %c0_7 = arith.constant 0 : index
      %12 = vector.load %arg6[%c0_6, %c0_7] : memref<3x1xf32, #tpu.memory_space<vmem>>, vector<3x1xf32>
      %13 = arith.addf %11, %12 : vector<3x1xf32>
      %cst = arith.constant 5.000000e-01 : f32
      %14 = vector.broadcast %cst : f32 to vector<3x1xf32>
      %15 = arith.mulf %14, %13 : vector<3x1xf32>
      %c0_8 = arith.constant 0 : index
      %c0_9 = arith.constant 0 : index
      %16 = vector.load %arg7[%c0_8, %c0_9] : memref<3x1xf32, #tpu.memory_space<vmem>>, vector<3x1xf32>
      %c0_10 = arith.constant 0 : index
      %c0_11 = arith.constant 0 : index
      %17 = vector.load %arg8[%c0_10, %c0_11] : memref<3x1xf32, #tpu.memory_space<vmem>>, vector<3x1xf32>
      %18 = arith.addf %16, %17 : vector<3x1xf32>
      %cst_12 = arith.constant 5.000000e-01 : f32
      %19 = vector.broadcast %cst_12 : f32 to vector<3x1xf32>
      %20 = arith.mulf %19, %18 : vector<3x1xf32>
      %c0_13 = arith.constant 0 : index
      %c0_14 = arith.constant 0 : index
      %21 = vector.load %arg8[%c0_13, %c0_14] : memref<3x1xf32, #tpu.memory_space<vmem>>, vector<3x1xf32>
      %c0_15 = arith.constant 0 : index
      %c0_16 = arith.constant 0 : index
      %22 = vector.load %arg7[%c0_15, %c0_16] : memref<3x1xf32, #tpu.memory_space<vmem>>, vector<3x1xf32>
      %23 = arith.subf %21, %22 : vector<3x1xf32>
      %cst_17 = arith.constant 1.000000e+00 : f32
      %24 = vector.broadcast %cst_17 : f32 to vector<3x1xf32>
      %25 = arith.addf %24, %23 : vector<3x1xf32>
      %c0_18 = arith.constant 0 : index
      %c0_19 = arith.constant 0 : index
      %26 = vector.load %arg6[%c0_18, %c0_19] : memref<3x1xf32, #tpu.memory_space<vmem>>, vector<3x1xf32>
      %c0_20 = arith.constant 0 : index
      %c0_21 = arith.constant 0 : index
      %27 = vector.load %arg5[%c0_20, %c0_21] : memref<3x1xf32, #tpu.memory_space<vmem>>, vector<3x1xf32>
      %28 = arith.subf %26, %27 : vector<3x1xf32>
      %29 = arith.subf %25, %28 : vector<3x1xf32>
      %c0_22 = arith.constant 0 : index
      %c0_23 = arith.constant 0 : index
      %30 = vector.load %arg3[%c0_22, %c0_23] : memref<3x256xf32, #tpu.memory_space<vmem>>, vector<3x256xf32>
      %31 = vector.broadcast %20 : vector<3x1xf32> to vector<3x256xf32>
      %32 = arith.subf %30, %31 : vector<3x256xf32>
      %33 = vector.broadcast %29 : vector<3x1xf32> to vector<3x256xf32>
      %34 = arith.mulf %32, %33 : vector<3x256xf32>
      %35 = vector.broadcast %15 : vector<3x1xf32> to vector<3x256xf32>
      %36 = arith.addf %34, %35 : vector<3x256xf32>
      %c0_24 = arith.constant 0 : index
      %c0_25 = arith.constant 0 : index
      %37 = vector.load %arg4[%c0_24, %c0_25] : memref<3x256xf32, #tpu.memory_space<vmem>>, vector<3x256xf32>
      tpu.vector_store %arg4[%c0_24, %c0_25], %36 {strides = array<i32>} : memref<3x256xf32, #tpu.memory_space<vmem>>, vector<3x256xf32>,
    } else {
    }
    return
  }
  func.func @transform_0(%arg0: i32, %arg1: i32) -> (i32, i32) {
    %c1_i32 = arith.constant 1 : i32
    %0 = arith.subi %c1_i32, %arg0 : i32
    %1 = arith.muli %arg1, %0 : i32
    %c0_i32 = arith.constant 0 : i32
    %c0_i32_0 = arith.constant 0 : i32
    return %c0_i32, %1 : i32, i32
  }
  func.func @transform_1(%arg0: i32, %arg1: i32) -> (i32, i32) {
    %c0_i32 = arith.constant 0 : i32
    %c0_i32_0 = arith.constant 0 : i32
    return %c0_i32, %arg1 : i32, i32
  }
  func.func @transform_2(%arg0: i32, %arg1: i32) -> (i32, i32) {
    %0 = arith.muli %arg1, %arg0 : i32
    %c0_i32 = arith.constant 0 : i32
    %c0_i32_0 = arith.constant 0 : i32
    return %c0_i32, %0 : i32, i32
  }
}

</mosaic_0001>

<llo_original>
// kernel: tpu_custom_call.1
$region0: #{tpu_custom_call.1}
  #allocation0 [shape = 'u32[]', space=smem, size = 0x4, offset = 0x4, fixed_abs, tag = 'smem constant byte address 0x4 - core index']
  #allocation1 [shape = 'u32[144,128]{1,0:T(1,128)}', space=vmem, size = 0x12000, scoped, tag = 'internal scratch']
  #allocation2 [shape = 'f32[3,1]{1,0:T(4,128)}', space=vmem, size = 0x800, scoped, tag = 'scratch operand']
  #allocation3 [shape = 'f32[3,1]{1,0:T(4,128)}', space=vmem, size = 0x800, scoped, tag = 'scratch operand']
  #allocation4 [shape = 'f32[3,1]{1,0:T(4,128)}', space=vmem, size = 0x800, scoped, tag = 'scratch operand']
  #allocation5 [shape = 'f32[3,1]{1,0:T(4,128)}', space=vmem, size = 0x800, scoped, tag = 'scratch operand']
  %s0 = inlined_call_operand.hbm [shape: f32[3,256], index: 0, kind: input, shape index: {}]
  %s1 = inlined_call_operand.hbm [shape: f32[3,256], index: 1, kind: input, shape index: {}]
  %s2 = inlined_call_operand.hbm [shape: f32[3,256], index: 2, kind: output, shape index: {}]
  %s3 = sld [smem:[#allocation0]]
  $region61: #{tpu_custom_call.1} parent=0
    _
  %s5 = ssub.s32 1, %s3
  %s6 = scalar_select 0, %s5, %s3
  $region1: #{tpu_custom_call.1} parent=0
    #allocation6 [shape = 'u8[8192]{0}', space=vmem, size = 0x2000, scoped, tag = 'input window, operand 0']
    #allocation7 [shape = 's32[2]{0}', space=sflag, size = 0x8, scoped, tag = 'scoped memory for tpu_custom_call.1']
    #allocation8 [shape = 's32[2]{0}', space=sflag, size = 0x8, scoped, tag = 'scoped memory for tpu_custom_call.1']
    #allocation9 [shape = 'u8[4096]{0}', space=vmem, size = 0x1000, scoped, tag = 'input window, operand 1, single buffered']
    #allocation10 [shape = 's32[1]{0}', space=sflag, size = 0x4, scoped, tag = 'scoped memory for tpu_custom_call.1']
    #allocation11 [shape = 'u8[8192]{0}', space=vmem, size = 0x2000, scoped, tag = 'output window, operand 0']
    %7 = vsyncpa [#allocation7], 0
    %s8 = scalar_lea.sflag [#allocation7], 1
    %9 = vsyncpa %s8, 0
    %10 = vsyncpa [#allocation10], 0
    %11 = vsyncpa [#allocation8], 0
    %s12 = scalar_lea.sflag [#allocation8], 1
    %13 = vsyncpa %s12, 0
    loop: start=0, step=1, limit=4
    $region2: #{tpu_custom_call.1} parent=1 // loop_pre_header
      _
    $region3: #{tpu_custom_call.1} parent=1 // loop_header
      %s15 = sphi 0, %s19
      %p16 = scmp.ge.s32.totalorder %s15, 4
      %s22 = sphi 0, %s34
      %s23 = sphi 0, %s30
      %s24 = sphi 0, %s22
      %s25 = sphi 0, %s23
      %s26 = sphi 0, %s24
      %s27 = sphi 0, %s25
      %s41 = sphi 0, %s43
      %s44 = sphi 0, %s41
      %s45 = sphi 0, %s44
      %s61 = sphi 0, %s45
      %s67 = sphi 0, %s69
      %s70 = sphi 0, %s67
      %s71 = sphi 0, %s70
      %s87 = sphi 0, %s71
      %s95 = sphi 0, %s97
      %s98 = sphi 0, %s95
      %s99 = sphi 0, %s98
      %s115 = sphi 0, %s99
    $region4: #{tpu_custom_call.1} parent=1 // loop_header_branch
      %18 = sbr.rel (%p16) target = $region8
    $region5: #{tpu_custom_call.1} parent=1 // loop_body
      %s20 = ssub.s32 %s15, 1
      %s21 = ssub.s32 %s15, 2
      %s28 = sadd.s32 1, %s23
      %p29 = scmp.ge.s32.totalorder %s28, 1
      %s30 = scalar_select %p29, 0, %s28
      %s31 = sadd.s32 1, %s22
      %s32 = scalar_select %p29, %s31, %s22
      %p33 = scmp.ge.s32.totalorder %s32, 2
      %s34 = scalar_select %p33, 0, %s32
      %s35 = ssub.s32 1, %s22
      %s36 = smul.u32 %s23, %s35
      %s37 = ssub.s32 1, %s34
      %s38 = smul.u32 %s30, %s37
      %s39 = ssub.s32 %s36, %s38
      %p40 = scmp.eq.s32.totalorder %s39, 0
      %s42 = sadd.s32 %s41, 1
      %s43 = scalar_select %p40, %s41, %s42
      %p46 = pneg %p40
      %p47 = scmp.eq.s32.totalorder %s15, 1
      %p48 = por %p46, %p47
      %p49 = scmp.ne.s32.totalorder %s41, %s44
      %p50 = scmp.eq.s32.totalorder %s15, 0
      %p51 = por %p49, %p50
      %p52 = scmp.ne.s32.totalorder %s41, %s44
      %p53 = scmp.eq.s32.totalorder %s20, 1
      %p54 = por %p52, %p53
      %p55 = scmp.ne.s32.totalorder %s44, %s45
      %p56 = scmp.eq.s32.totalorder %s20, 0
      %p57 = por %p55, %p56
      %p58 = scmp.ne.s32.totalorder %s44, %s45
      %p59 = scmp.eq.s32.totalorder %s21, 1
      %p60 = por %p58, %p59
      %p62 = scmp.ne.s32.totalorder %s45, %s61
      %p63 = scmp.eq.s32.totalorder %s21, 0
      %p64 = por %p62, %p63
      %s65 = ssub.s32 %s23, %s30
      %p66 = scmp.eq.s32.totalorder %s65, 0
      %s68 = sadd.s32 %s67, 1
      %s69 = scalar_select %p66, %s67, %s68
      %p72 = pneg %p66
      %p73 = scmp.eq.s32.totalorder %s15, 1
      %p74 = por %p72, %p73
      %p75 = scmp.ne.s32.totalorder %s67, %s70
      %p76 = scmp.eq.s32.totalorder %s15, 0
      %p77 = por %p75, %p76
      %p78 = scmp.ne.s32.totalorder %s67, %s70
      %p79 = scmp.eq.s32.totalorder %s20, 1
      %p80 = por %p78, %p79
      %p81 = scmp.ne.s32.totalorder %s70, %s71
      %p82 = scmp.eq.s32.totalorder %s20, 0
      %p83 = por %p81, %p82
      %p84 = scmp.ne.s32.totalorder %s70, %s71
      %p85 = scmp.eq.s32.totalorder %s21, 1
      %p86 = por %p84, %p85
      %p88 = scmp.ne.s32.totalorder %s71, %s87
      %p89 = scmp.eq.s32.totalorder %s21, 0
      %p90 = por %p88, %p89
      %s91 = smul.u32 %s23, %s22
      %s92 = smul.u32 %s30, %s34
      %s93 = ssub.s32 %s91, %s92
      %p94 = scmp.eq.s32.totalorder %s93, 0
      %s96 = sadd.s32 %s95, 1
      %s97 = scalar_select %p94, %s95, %s96
      %p100 = pneg %p94
      %p101 = scmp.eq.s32.totalorder %s15, 1
      %p102 = por %p100, %p101
      %p103 = scmp.ne.s32.totalorder %s95, %s98
      %p104 = scmp.eq.s32.totalorder %s15, 0
      %p105 = por %p103, %p104
      %p106 = scmp.ne.s32.totalorder %s95, %s98
      %p107 = scmp.eq.s32.totalorder %s20, 1
      %p108 = por %p106, %p107
      %p109 = scmp.ne.s32.totalorder %s98, %s99
      %p110 = scmp.eq.s32.totalorder %s20, 0
      %p111 = por %p109, %p110
      %p112 = scmp.ne.s32.totalorder %s98, %s99
      %p113 = scmp.eq.s32.totalorder %s21, 1
      %p114 = por %p112, %p113
      %p116 = scmp.ne.s32.totalorder %s99, %s115
      %p117 = scmp.eq.s32.totalorder %s21, 0
      %p118 = por %p116, %p117
      %p119 = scmp.le.s32.totalorder 1, %s15
      %p120 = scmp.lt.s32.totalorder %s15, 3
      %p121 = pnand %p119, %p120
      %p122 = pneg %p121
      // Predicated region
      $region9: #{tpu_custom_call.1} parent=5 // pred_check
        _
      $region10: #{tpu_custom_call.1} parent=5 // pred_check_branch
        %124 = sbr.rel (%p121) target = $region12
      $region11: #{tpu_custom_call.1} parent=5 // pred_region
        %s125 = ssub.s32 %s15, 1
        // Predicated region
        $region13: #{tpu_custom_call.1} parent=11 // pred_check
          %p126 = pneg %p83
        $region14: #{tpu_custom_call.1} parent=11 // pred_check_branch
          %128 = sbr.rel (%p126) target = $region16
        $region15: #{tpu_custom_call.1} parent=11 // pred_region
          %s129 = smul.u32 2, %s25
          %s131 = ssub.s32 128, 128
          %132 = vsyncadd [#allocation10], %s131
          %s133 = smul.addr %s129, 64
          %s134 = scalar_lea.hbm %s1, %s133
          %s136 = sshll.u32 [#allocation9], 4
          %s137 = int_to_ptr.vmem [resolvable:$true] %s136
          %139 = dma.hbm_to_vmem [thread:$0]  %s134, 128, %s137, [#allocation10]
        $region16: #{tpu_custom_call.1} parent=11 // pred_fallthru
          _
      $region12: #{tpu_custom_call.1} parent=5 // pred_fallthru
        _
      %p140 = scmp.lt.s32.totalorder %s15, 2
      // Predicated region
      $region17: #{tpu_custom_call.1} parent=5 // pred_check
        %p141 = pneg %p140
      $region18: #{tpu_custom_call.1} parent=5 // pred_check_branch
        %143 = sbr.rel (%p141) target = $region20
      $region19: #{tpu_custom_call.1} parent=5 // pred_region
        // Predicated region
        $region21: #{tpu_custom_call.1} parent=19 // pred_check
          %p144 = pneg %p51
        $region22: #{tpu_custom_call.1} parent=19 // pred_check_branch
          %146 = sbr.rel (%p144) target = $region24
        $region23: #{tpu_custom_call.1} parent=19 // pred_region
          %s147 = sand.u32 %s41, 1
          %s148 = scalar_lea.sflag [#allocation7], %s147
          %s149 = sand.u32 %s41, 1
          %s150 = smul.addr %s149, 8
          %s151 = scalar_lea.vmem [#allocation6], %s150
          %s152 = ssub.s32 1, %s22
          %s153 = smul.u32 %s23, %s152
          %s154 = smul.u32 2, %s153
          %s156 = ssub.s32 128, 128
          %157 = vsyncadd %s148, %s156
          %s158 = smul.addr %s154, 64
          %s159 = scalar_lea.hbm %s0, %s158
          %s161 = sshll.u32 %s151, 4
          %s162 = int_to_ptr.vmem [resolvable:$true] %s161
          %164 = dma.hbm_to_vmem [thread:$0]  %s159, 128, %s162, %s148
        $region24: #{tpu_custom_call.1} parent=19 // pred_fallthru
          _
      $region20: #{tpu_custom_call.1} parent=5 // pred_fallthru
        _
      %p165 = scmp.le.s32.totalorder 1, %s15
      %p166 = scmp.lt.s32.totalorder %s15, 3
      %p167 = pnand %p165, %p166
      %p168 = pneg %p167
      // Predicated region
      $region25: #{tpu_custom_call.1} parent=5 // pred_check
        _
      $region26: #{tpu_custom_call.1} parent=5 // pred_check_branch
        %170 = sbr.rel (%p167) target = $region28
      $region27: #{tpu_custom_call.1} parent=5 // pred_region
        %s171 = ssub.s32 %s15, 1
        %s172 = sand.u32 %s44, 1
        %s173 = scalar_lea.sflag [#allocation7], %s172
        %s174 = sand.u32 %s44, 1
        %s175 = smul.addr %s174, 8
        %s176 = scalar_lea.vmem [#allocation6], %s175
        // Predicated region
        $region29: #{tpu_custom_call.1} parent=27 // pred_check
          %p177 = pneg %p57
        $region30: #{tpu_custom_call.1} parent=27 // pred_check_branch
          %179 = sbr.rel (%p177) target = $region32
        $region31: #{tpu_custom_call.1} parent=27 // pred_region
          %180 = dma.done %s173, 128
        $region32: #{tpu_custom_call.1} parent=27 // pred_fallthru
          _
        // Predicated region
        $region33: #{tpu_custom_call.1} parent=27 // pred_check
          %p181 = pneg %p83
        $region34: #{tpu_custom_call.1} parent=27 // pred_check_branch
          %183 = sbr.rel (%p181) target = $region36
        $region35: #{tpu_custom_call.1} parent=27 // pred_region
          %184 = dma.done [#allocation10], 128
        $region36: #{tpu_custom_call.1} parent=27 // pred_fallthru
          _
        %s185 = sand.u32 %s44, 1
        %s186 = scalar_lea.sflag [#allocation7], %s185
        %s187 = sand.u32 %s44, 1
        %s188 = smul.addr %s187, 8
        %s189 = scalar_lea.vmem [#allocation6], %s188
        %p190 = pneg %p57
        %p191 = pneg %p54
        %p192 = pneg %p83
        %p193 = pneg %p80
        %p194 = pneg %p111
        %p195 = pneg %p108
        %s196 = sand.u32 %s98, 1
        %s197 = scalar_lea.sflag [#allocation8], %s196
        %s198 = sand.u32 %s98, 1
        %s199 = smul.addr %s198, 8
        %s200 = scalar_lea.vmem [#allocation11], %s199
        %s201 = ssub.s32 1, %s24
        %s202 = smul.u32 %s25, %s201
        %s203 = smul.u32 2, %s202
        %s204 = smul.u32 2, %s25
        %s205 = smul.u32 %s25, %s24
        %s206 = smul.u32 2, %s205
        %p207 = scmp.eq.s32.totalorder %s24, 0
        %p208 = scmp.eq.s32.totalorder %s25, 0
        %p209 = pnand %p207, %p208
        %p210 = pneg %p209
        // Predicated region
        $region37: #{tpu_custom_call.1} parent=27 // pred_check
          _
        $region38: #{tpu_custom_call.1} parent=27 // pred_check_branch
          %212 = sbr.rel (%p209) target = $region40
        $region39: #{tpu_custom_call.1} parent=27 // pred_region
          %vm213 = vcmask 2048
          %214 = vst.msk [vmem:[#allocation2] sm:$0x7] %vm213, inf
          %215 = vst.msk [vmem:[#allocation3] sm:$0x7] %vm213, -inf
          %216 = vst.msk [vmem:[#allocation4] sm:$0x7] %vm213, inf
          %217 = vst.msk [vmem:[#allocation5] sm:$0x7] %vm213, -inf
        $region40: #{tpu_custom_call.1} parent=27 // pred_fallthru
          _
        // Predicated region
        $region41: #{tpu_custom_call.1} parent=27 // pred_check
          %p218 = pneg %p207
        $region42: #{tpu_custom_call.1} parent=27 // pred_check_branch
          %220 = sbr.rel (%p218) target = $region44
        $region43: #{tpu_custom_call.1} parent=27 // pred_region
          %v221 = vld [vmem:[%s176] sm:$0x77]
          %v222 = vld [vmem:[#allocation9] sm:$0x77]
          %v223 = vld [vmem:[#allocation2] sm:$0x7]
          %v225 = vcombine.high %v221, %v221
          %vm227 = vcmask 1042432
          %v228 = vsel %vm227, %v221, inf
          %v229 = vsel %vm227, %v225, inf
          %v230 = vmin.f32 %v228, %v229
          %231 = vmin.xlane.f32.xlu0 %v230
          %v232 = vpop.xlane.xlu0 %231
          %v233 = vmin.f32 %v223, %v232
          %vm234 = vcmask 2048
          %235 = vst.msk [vmem:[#allocation2] sm:$0x7] %vm234, %v233
          %v236 = vld [vmem:[#allocation3] sm:$0x7]
          %v237 = vsel %vm227, %v221, -inf
          %v238 = vsel %vm227, %v225, -inf
          %v239 = vmax.f32 %v237, %v238
          %240 = vmax.xlane.f32.xlu0 %v239
          %v241 = vpop.xlane.xlu0 %240
          %v242 = vmax.f32 %v236, %v241
          %243 = vst.msk [vmem:[#allocation3] sm:$0x7] %vm234, %v242
          %v244 = vld [vmem:[#allocation4] sm:$0x7]
          %v246 = vcombine.high %v222, %v222
          %v248 = vsel %vm227, %v222, inf
          %v249 = vsel %vm227, %v246, inf
          %v250 = vmin.f32 %v248, %v249
          %251 = vmin.xlane.f32.xlu0 %v250
          %v252 = vpop.xlane.xlu0 %251
          %v253 = vmin.f32 %v244, %v252
          %254 = vst.msk [vmem:[#allocation4] sm:$0x7] %vm234, %v253
          %v255 = vld [vmem:[#allocation5] sm:$0x7]
          %v256 = vsel %vm227, %v222, -inf
          %v257 = vsel %vm227, %v246, -inf
          %v258 = vmax.f32 %v256, %v257
          %259 = vmax.xlane.f32.xlu0 %v258
          %v260 = vpop.xlane.xlu0 %259
          %v261 = vmax.f32 %v255, %v260
          %262 = vst.msk [vmem:[#allocation5] sm:$0x7] %vm234, %v261
        $region44: #{tpu_custom_call.1} parent=27 // pred_fallthru
          _
        %p263 = scmp.eq.s32.totalorder %s24, 1
        // Predicated region
        $region45: #{tpu_custom_call.1} parent=27 // pred_check
          %p264 = pneg %p263
        $region46: #{tpu_custom_call.1} parent=27 // pred_check_branch
          %266 = sbr.rel (%p264) target = $region48
        $region47: #{tpu_custom_call.1} parent=27 // pred_region
          %v267 = vld [vmem:[#allocation2] sm:$0x7]
          %v268 = vld [vmem:[#allocation3] sm:$0x7]
          %v269 = vadd.f32 %v267, %v268
          %v270 = vmul.f32 %v269, 0.5
          %v271 = vld [vmem:[#allocation4] sm:$0x7]
          %v272 = vld [vmem:[#allocation5] sm:$0x7]
          %v273 = vadd.f32 %v271, %v272
          %v274 = vmul.f32 %v273, 0.5
          %v275 = vsub.f32 %v272, %v271
          %v276 = vadd.f32 %v275, 1.0
          %v277 = vsub.f32 %v268, %v267
          %v278 = vsub.f32 %v276, %v277
          %v279 = vld [vmem:[#allocation9] sm:$0x77]
          %281 = vset.pattern.permute.xlu0 0
          %282 = vperm.xlu0 %281, %v274
          %v283 = vpop.permute.xlu0 %282
          %v285 = vunpack.c.l.s4 839922192
          %v286 = vunpack.c.0.s8 %v285
          %v287 = vlaneseq
          %v288 = vshrl.u32 %v287, 7
          %v289 = vsub.s32 %v286, %v288
          %v290 = vrot.slane %v283, %v289
          %v292 = vsub.f32 %v279, %v290
          %294 = vset.pattern.permute.xlu0 0
          %295 = vperm.xlu0 %294, %v278
          %v296 = vpop.permute.xlu0 %295
          %v298 = vunpack.c.l.s4 839922192
          %v299 = vunpack.c.0.s8 %v298
          %v300 = vlaneseq
          %v301 = vshrl.u32 %v300, 7
          %v302 = vsub.s32 %v299, %v301
          %v303 = vrot.slane %v296, %v302
          %v305 = vmul.f32 %v292, %v303
          %307 = vset.pattern.permute.xlu0 0
          %308 = vperm.xlu0 %307, %v270
          %v309 = vpop.permute.xlu0 %308
          %v311 = vunpack.c.l.s4 839922192
          %v312 = vunpack.c.0.s8 %v311
          %v313 = vlaneseq
          %v314 = vshrl.u32 %v313, 7
          %v315 = vsub.s32 %v312, %v314
          %v316 = vrot.slane %v309, %v315
          %v318 = vadd.f32 %v305, %v316
          %319 = vst [vmem:[%s200] sm:$0x77] %v318
        $region48: #{tpu_custom_call.1} parent=27 // pred_fallthru
          _
        %s320 = sand.u32 %s98, 1
        %s321 = scalar_lea.sflag [#allocation8], %s320
        %s322 = sand.u32 %s98, 1
        %s323 = smul.addr %s322, 8
        %s324 = scalar_lea.vmem [#allocation11], %s323
        // Predicated region
        $region49: #{tpu_custom_call.1} parent=27 // pred_check
          %p325 = pneg %p108
        $region50: #{tpu_custom_call.1} parent=27 // pred_check_branch
          %327 = sbr.rel (%p325) target = $region52
        $region51: #{tpu_custom_call.1} parent=27 // pred_region
          %s328 = smul.u32 %s25, %s24
          %s329 = smul.u32 2, %s328
          %s331 = ssub.s32 128, 128
          %332 = vsyncadd %s321, %s331
          %s333 = smul.addr %s329, 64
          %s334 = scalar_lea.hbm %s2, %s333
          %s336 = sshll.u32 %s324, 4
          %s337 = int_to_ptr.vmem [resolvable:$true] %s336
          %339 = dma.vmem_to_hbm [thread:$0]  %s337, 128, %s334, %s321
        $region52: #{tpu_custom_call.1} parent=27 // pred_fallthru
          _
      $region28: #{tpu_custom_call.1} parent=5 // pred_fallthru
        _
      %p340 = scmp.le.s32.totalorder 2, %s15
      // Predicated region
      $region53: #{tpu_custom_call.1} parent=5 // pred_check
        %p341 = pneg %p340
      $region54: #{tpu_custom_call.1} parent=5 // pred_check_branch
        %343 = sbr.rel (%p341) target = $region56
      $region55: #{tpu_custom_call.1} parent=5 // pred_region
        %s344 = ssub.s32 %s15, 2
        // Predicated region
        $region57: #{tpu_custom_call.1} parent=55 // pred_check
          %p345 = pneg %p114
        $region58: #{tpu_custom_call.1} parent=55 // pred_check_branch
          %347 = sbr.rel (%p345) target = $region60
        $region59: #{tpu_custom_call.1} parent=55 // pred_region
          %s348 = sand.u32 %s99, 1
          %s349 = scalar_lea.sflag [#allocation8], %s348
          %s350 = sand.u32 %s99, 1
          %s351 = smul.addr %s350, 8
          %s352 = scalar_lea.vmem [#allocation11], %s351
          %353 = dma.done %s349, 128
        $region60: #{tpu_custom_call.1} parent=55 // pred_fallthru
          _
      $region56: #{tpu_custom_call.1} parent=5 // pred_fallthru
        _
    $region6: #{tpu_custom_call.1} parent=1 // loop_footer
      %s19 = sadd.s32 1, %s15
    $region7: #{tpu_custom_call.1} parent=1 // loop_footer_branch
      %14 = sbr.rel target = $region3
    $region8: #{tpu_custom_call.1} parent=1 // loop_exit
      _
    %354 = vsyncpa [#allocation7], 1
    %s355 = scalar_lea.sflag [#allocation7], 1
    %356 = vsyncpa %s355, 1
    %357 = vsyncpa [#allocation10], 1
    %358 = vsyncpa [#allocation8], 1
    %s359 = scalar_lea.sflag [#allocation8], 1
    %360 = vsyncpa %s359, 1

</llo_original>
